<compile_context>
chip_gen: v6e
topology: v6e:2x2x1
jax: 0.10.0
libtpu: 0.0.40
codegen_flags: <defaults>
</compile_context>

<pallas_src>
import functools

import jax
import jax.numpy as jnp
import numpy as np
from jax import lax
from jax.experimental import pallas as pl
from jax.experimental.pallas import tpu as pltpu


def _skconv_attention_kernel(x_ref, wfc_t_ref, bfc_ref, wfcs_t_ref, bfcs_ref,
                             out_ref, acc_ref, *, num_branches, c_pad, inv_hw,
                             ts, s_total, needs_mask):
    """Fused tiled-GAP -> fc -> fused branch fcs -> softmax(over branches).

    x_ref:      (TB, C, TS)     input tile (any float dtype; accumulated in f32)
    wfc_t_ref:  (C, d)          f32  transposed nn.Linear(features, d) weight
    bfc_ref:    (1, d)          f32
    wfcs_t_ref: (d, M*Cp)       f32  all branch weights fused + lane-padded
    bfcs_ref:   (1, M*Cp)       f32
    out_ref:    (TB, 1, M*Cp)   f32  lane-dense attention output
    acc_ref:    (TB, C, 128)    f32  lane-chunked GAP partial-sum accumulator
    """
    s = pl.program_id(1)

    @pl.when(s == 0)
    def _init():
        acc_ref[...] = jnp.zeros_like(acc_ref)

    num_full = ts // 128
    tail = ts - num_full * 128   # nonzero only when TS == S (single spatial tile)

    # ---- lane-chunked VPU accumulation (no per-step XLU reduce) -------------
    if num_full > 0:
        def _chunk(k, carry):
            off = pl.multiple_of(k * 128, 128)
            c = x_ref[:, :, pl.ds(off, 128)].astype(jnp.float32)
            if needs_mask:
                # Ragged last spatial tile: lanes past the true extent hold
                # undefined values -> zero them before accumulating.
                valid = s_total - s * ts
                lane = lax.broadcasted_iota(jnp.int32, c.shape, 2) + k * 128
                c = jnp.where(lane < valid, c, 0.0)
            acc_ref[...] += c
            return carry

        lax.fori_loop(0, num_full, _chunk, 0, unroll=True)

    if tail > 0:
        # Only reachable when the whole spatial extent fits in one tile
        # (TS == S), so there is no out-of-bounds data to mask.
        c = x_ref[:, :, num_full * 128:num_full * 128 + tail]
        acc_ref[:, :, :tail] += c.astype(jnp.float32)

    @pl.when(s == pl.num_programs(1) - 1)
    def _finalize():
        # Single XLU cross-lane reduce per batch tile.
        fea_s = jnp.sum(acc_ref[...], axis=-1) * inv_hw                 # (TB, C)
        fea_z = jnp.dot(fea_s, wfc_t_ref[...],
                        preferred_element_type=jnp.float32) + bfc_ref[...]
        # One wide MXU call for all M branches: (TB, d) @ (d, M*Cp).
        v = jnp.dot(fea_z, wfcs_t_ref[...],
                    preferred_element_type=jnp.float32) + bfcs_ref[...]
        vs = [v[:, m * c_pad:(m + 1) * c_pad] for m in range(num_branches)]
        vmax = functools.reduce(jnp.maximum, vs)
        es = [jnp.exp(vm - vmax) for vm in vs]
        denom = functools.reduce(lambda a, b: a + b, es)
        inv = 1.0 / denom        # exact divide; epilogue is tiny, keep accuracy
        attn = jnp.concatenate([e * inv for e in es], axis=-1)          # (TB, M*Cp)
        out_ref[...] = attn[:, None, :]


def _round_up(a, m):
    return ((a + m - 1) // m) * m


def _pick_batch_tile(batch):
    """Largest divisor of batch (<= 8) that keeps grid[0] >= 2 when batch >= 2,
    so both v7x TensorCores get batch tiles (no-op on single-TC v5e/v6e)."""
    if batch <= 1:
        return 1
    cap = min(8, batch // 2)
    for tb in range(cap, 0, -1):
        if batch % tb == 0:
            return tb
    return 1


def _vmem_budgets():
    """(vmem_limit_bytes, x_tile_budget_cap_bytes) per TPU generation."""
    try:
        cap = getattr(pltpu.get_tpu_info(), "vmem_capacity_bytes", None)
    except Exception:
        cap = None
    if cap is not None and cap >= 100 * 1024 * 1024:
        # v5e / v6e: 128 MiB physical VMEM -> bigger tiles, fewer grid steps.
        return 64 * 1024 * 1024, 48 * 1024 * 1024
    # v7x (64 MiB physical) or unknown: stay conservative.
    return 32 * 1024 * 1024, 16 * 1024 * 1024


def skconv_attention(x, wfc, bfc, wfcs, bfcs, *, spatial_tile_cap=None):
    """x: (B, C, H, W);  wfc: (d, C);  bfc: (d,);  wfcs: (M, C, d);  bfcs: (M, C).

    Returns attention vectors of shape (B, M, C, 1, 1), matching PyTorch.
    Feed x in bfloat16 (cast at the caller, not here) to halve HBM traffic;
    the kernel accumulates and computes the fc/softmax epilogue in f32.
    """
    B, C, H, W = x.shape
    M, _, d = wfcs.shape
    S = H * W
    itemsize = x.dtype.itemsize
    f32 = jnp.float32
    Cp = _round_up(C, 128)

    # ---- batch tile ----------------------------------------------------------
    # TODO(synk): when C % 8 != 0, fold channels into sublane-aligned groups to
    # avoid sublane padding of every (TB, C, TS) tile (perf only; correct as-is).
    TB = _pick_batch_tile(B)

    # ---- VMEM budget: account for everything that is (double-)buffered -------
    vmem_limit, x_cap = _vmem_budgets()
    fixed = (2 * 4 * (C * d + d + d * M * Cp + M * Cp)   # weights/biases, 2 bufs each
             + 2 * 4 * (TB * M * Cp)                     # output, 2 bufs
             + 4 * (TB * C * 128)                        # acc scratch
             + 2 * 1024 * 1024)                          # compiler-internal headroom
    x_budget = min(x_cap, vmem_limit - fixed)
    x_budget = max(x_budget, 2 * TB * C * 128 * itemsize)   # floor: one 128-lane chunk

    # ---- spatial tile (ragged-aware) -----------------------------------------
    ts_cap = max(128, (x_budget // (2 * TB * C * itemsize)) // 128 * 128)
    if spatial_tile_cap is not None:
        ts_cap = max(128, min(ts_cap, _round_up(spatial_tile_cap, 128)))
    ts_cap = min(ts_cap, _round_up(S, 128))

    if S <= ts_cap:
        TS = S                       # full-extent block is always legal
        needs_mask = False
    else:
        TS = ts_cap                  # multiple of 128
        if S % 128 == 0 and S % TS != 0:
            # Prefer a nearby exact divisor (skips in-kernel masking) but never
            # collapse below half the budget-chosen tile.
            t = TS
            while t >= max(128, TS // 2):
                if S % t == 0:
                    TS = t
                    break
                t -= 128
        needs_mask = (S % TS != 0)

    # NOTE: the spatial (reduction) axis MUST stay the innermost grid axis and
    # "arbitrary" -- the acc scratch is re-zeroed at s == 0 for each batch tile;
    # reordering the grid would leak partial sums across batch tiles.
    grid = (B // TB, pl.cdiv(S, TS))

    # ---- weight / bias prep (fuse M branches, lane-pad each to Cp) ----------
    wfc_t = jnp.transpose(wfc).astype(f32)                      # (C, d)
    bfc2 = bfc.reshape(1, d).astype(f32)                        # (1, d)
    wfcs_t = jnp.transpose(wfcs, (0, 2, 1)).astype(f32)         # (M, d, C)
    wfcs_t = jnp.pad(wfcs_t, ((0, 0), (0, 0), (0, Cp - C)))     # (M, d, Cp)
    wfcs_flat = jnp.transpose(wfcs_t, (1, 0, 2)).reshape(d, M * Cp)
    bfcs_p = jnp.pad(bfcs.astype(f32), ((0, 0), (0, Cp - C)))   # (M, Cp)
    bfcs_flat = bfcs_p.reshape(1, M * Cp)

    x3 = x.reshape(B, C, S)    # keep caller's dtype (bf16 recommended)

    kernel = functools.partial(_skconv_attention_kernel,
                               num_branches=M, c_pad=Cp, inv_hw=float(1.0 / S),
                               ts=TS, s_total=S, needs_mask=needs_mask)

    cost = pl.CostEstimate(
        flops=int(2 * B * C * S + 2 * B * C * d + 2 * B * d * M * Cp),
        transcendentals=int(B * M * Cp),
        bytes_accessed=int(B * C * S * itemsize
                           + (C * d + d + d * M * Cp + M * Cp) * 4
                           + B * M * Cp * 4),
    )

    attn_flat = pl.pallas_call(
        kernel,
        out_shape=jax.ShapeDtypeStruct((B, 1, M * Cp), f32),
        grid_spec=pltpu.PrefetchScalarGridSpec(
            num_scalar_prefetch=0,
            grid=grid,
            in_specs=[
                pl.BlockSpec((TB, C, TS), lambda b, s_idx: (b, 0, s_idx)),
                pl.BlockSpec((C, d), lambda b, s_idx: (0, 0)),
                pl.BlockSpec((1, d), lambda b, s_idx: (0, 0)),
                pl.BlockSpec((d, M * Cp), lambda b, s_idx: (0, 0)),
                pl.BlockSpec((1, M * Cp), lambda b, s_idx: (0, 0)),
            ],
            # Singleton middle axis keeps TB out of the (8,128) constraint.
            out_specs=pl.BlockSpec((TB, 1, M * Cp), lambda b, s_idx: (b, 0, 0)),
            scratch_shapes=[pltpu.VMEM((TB, C, 128), jnp.float32)],
        ),
        compiler_params=pltpu.CompilerParams(
            dimension_semantics=("parallel", "arbitrary"),
            vmem_limit_bytes=vmem_limit,
        ),
        cost_estimate=cost,
    )(x3, wfc_t, bfc2, wfcs_flat, bfcs_flat)

    # (B, 1, M*Cp) -> (B, M, C, 1, 1)  (drop lane padding in the wrapper)
    attn = attn_flat.reshape(B, M, Cp)[:, :, :C]
    return attn.reshape(B, M, C, 1, 1)


def _reference(x, wfc, bfc, wfcs, bfcs):
    """Pure-JAX reference mirroring the PyTorch forward."""
    M = wfcs.shape[0]
    fea_s = x.mean(axis=(2, 3))                                  # (B, C)
    fea_z = fea_s @ wfc.T + bfc                                  # (B, d)
    v = jnp.stack([fea_z @ wfcs[m].T + bfcs[m] for m in range(M)], axis=1)
    attn = jax.nn.softmax(v, axis=1)                             # (B, M, C)
    return attn[..., None, None]


if __name__ == "__main__":
    # Module config: SKConv(features=4, WH=16, M=2, G=1, r=2, L=32)
    B, C, H, W = 2, 4, 16, 16
    M = 2
    r, L = 2, 32
    d = max(int(C / r), L)   # = 32

    key = jax.random.PRNGKey(0)
    kx, kw1, kb1, kw2, kb2 = jax.random.split(key, 5)

    x = jax.random.normal(kx, (B, C, H, W), dtype=jnp.float32)

    # Deterministic parameter init (PyTorch Linear-style uniform bounds).
    bound_fc = 1.0 / np.sqrt(C)
    wfc = jax.random.uniform(kw1, (d, C), jnp.float32, -bound_fc, bound_fc)
    bfc = jax.random.uniform(kb1, (d,), jnp.float32, -bound_fc, bound_fc)
    bound_fcs = 1.0 / np.sqrt(d)
    wfcs = jax.random.uniform(kw2, (M, C, d), jnp.float32, -bound_fcs, bound_fcs)
    bfcs = jax.random.uniform(kb2, (M, C), jnp.float32, -bound_fcs, bound_fcs)

    ref = _reference(x, wfc, bfc, wfcs, bfcs)

    # 1) Default tiling (single spatial step at this toy size, grid[0] = 2).
    out = jax.block_until_ready(skconv_attention(x, wfc, bfc, wfcs, bfcs))
    np.testing.assert_allclose(np.asarray(out), np.asarray(ref),
                               rtol=1e-5, atol=1e-5)
    assert out.shape == (B, M, C, 1, 1)

    # 2) Forced multi-step spatial reduction (exercises the accumulator path).
    out_tiled = jax.block_until_ready(
        skconv_attention(x, wfc, bfc, wfcs, bfcs, spatial_tile_cap=128))
    np.testing.assert_allclose(np.asarray(out_tiled), np.asarray(ref),
                               rtol=1e-5, atol=1e-5)

    # 3) Ragged spatial tiling (S = 272, TS = 128, masked tail tile).
    x_rag = jax.random.normal(kx, (B, C, 16, 17), dtype=jnp.float32)
    ref_rag = _reference(x_rag, wfc, bfc, wfcs, bfcs)
    out_rag = jax.block_until_ready(
        skconv_attention(x_rag, wfc, bfc, wfcs, bfcs, spatial_tile_cap=128))
    np.testing.assert_allclose(np.asarray(out_rag), np.asarray(ref_rag),
                               rtol=1e-5, atol=1e-5)

    # 4) Small non-128-aligned spatial extent (single tile, tail-chunk path).
    x_small = jax.random.normal(kx, (B, C, 10, 10), dtype=jnp.float32)
    ref_small = _reference(x_small, wfc, bfc, wfcs, bfcs)
    out_small = jax.block_until_ready(
        skconv_attention(x_small, wfc, bfc, wfcs, bfcs))
    np.testing.assert_allclose(np.asarray(out_small), np.asarray(ref_small),
                               rtol=1e-5, atol=1e-5)

    # 5) bf16 activations (the intended HBM-halving input dtype).
    x_bf = x.astype(jnp.bfloat16)
    ref_bf = _reference(x_bf.astype(jnp.float32), wfc, bfc, wfcs, bfcs)
    out_bf = jax.block_until_ready(skconv_attention(x_bf, wfc, bfc, wfcs, bfcs))
    np.testing.assert_allclose(np.asarray(out_bf), np.asarray(ref_bf),
                               rtol=1e-4, atol=1e-4)

    print("KERNEL_OK")
</pallas_src>

<mosaic_0001>
module attributes {stable_mosaic.version = 11 : i64} {
  func.func @_skconv_attention_kernel(%arg0: i32, %arg1: i32, %arg2: memref<1x4x256xf32, #tpu.memory_space<vmem>>, %arg3: memref<4x32xf32, #tpu.memory_space<vmem>>, %arg4: memref<1x32xf32, #tpu.memory_space<vmem>>, %arg5: memref<32x256xf32, #tpu.memory_space<vmem>>, %arg6: memref<1x256xf32, #tpu.memory_space<vmem>>, %arg7: memref<1x1x256xf32, #tpu.memory_space<vmem>>, %arg8: memref<1x4x128xf32, #tpu.memory_space<vmem>>) attributes {dimension_semantics = [#tpu.dimension_semantics<parallel>, #tpu.dimension_semantics<arbitrary>], iteration_bounds = array<i64: 2, 1>, scalar_prefetch = 0 : i64, scratch_operands = 1 : i64, tpu.core_type = #tpu.core_type<tc>, window_params = [{transform_indices = @transform_0, window_bounds = array<i64: 1, 4, 256>}, {pipeline_mode = #tpu.pipeline_mode<synchronous>, transform_indices = @transform_1, window_bounds = array<i64: 4, 32>}, {pipeline_mode = #tpu.pipeline_mode<synchronous>, transform_indices = @transform_2, window_bounds = array<i64: 1, 32>}, {pipeline_mode = #tpu.pipeline_mode<synchronous>, transform_indices = @transform_3, window_bounds = array<i64: 32, 256>}, {pipeline_mode = #tpu.pipeline_mode<synchronous>, transform_indices = @transform_4, window_bounds = array<i64: 1, 256>}, {transform_indices = @transform_5, window_bounds = array<i64: 1, 1, 256>}]} {
    %c0_i32 = arith.constant 0 : i32
    %0 = arith.cmpi eq, %arg1, %c0_i32 : i32
    %1 = arith.extui %0 : i1 to i32
    %c0_i32_0 = arith.constant 0 : i32
    %2 = arith.cmpi ne, %1, %c0_i32_0 : i32
    scf.if %2 {
      %cst = arith.constant 0.000000e+00 : f32
      %20 = vector.broadcast %cst : f32 to vector<1x4x128xf32>
      %c0_20 = arith.constant 0 : index
      %c0_21 = arith.constant 0 : index
      %c0_22 = arith.constant 0 : index
      %21 = vector.load %arg8[%c0_20, %c0_21, %c0_22] : memref<1x4x128xf32, #tpu.memory_space<vmem>>, vector<1x4x128xf32>
      tpu.vector_store %arg8[%c0_20, %c0_21, %c0_22], %20 {strides = array<i32>} : memref<1x4x128xf32, #tpu.memory_space<vmem>>, vector<1x4x128xf32>,
    } else {
    }
    %c0_i32_1 = arith.constant 0 : i32
    %c128_i32 = arith.constant 128 : i32
    %3 = arith.muli %c0_i32_1, %c128_i32 : i32
    %4 = tpu.assume_multiple %3, 128 : i32
    %c0 = arith.constant 0 : index
    %c0_2 = arith.constant 0 : index
    %5 = arith.index_cast %4 : i32 to index
    %6 = vector.load %arg2[%c0, %c0_2, %5] : memref<1x4x256xf32, #tpu.memory_space<vmem>>, vector<1x4x128xf32>
    %c0_3 = arith.constant 0 : index
    %c0_4 = arith.constant 0 : index
    %c0_5 = arith.constant 0 : index
    %7 = vector.load %arg8[%c0_3, %c0_4, %c0_5] : memref<1x4x128xf32, #tpu.memory_space<vmem>>, vector<1x4x128xf32>
    %8 = arith.addf %7, %6 : vector<1x4x128xf32>
    %c0_6 = arith.constant 0 : index
    %c0_7 = arith.constant 0 : index
    %c0_8 = arith.constant 0 : index
    %9 = vector.load %arg8[%c0_6, %c0_7, %c0_8] : memref<1x4x128xf32, #tpu.memory_space<vmem>>, vector<1x4x128xf32>
    tpu.vector_store %arg8[%c0_6, %c0_7, %c0_8], %8 {strides = array<i32>} : memref<1x4x128xf32, #tpu.memory_space<vmem>>, vector<1x4x128xf32>,
    %c1_i32 = arith.constant 1 : i32
    %c128_i32_9 = arith.constant 128 : i32
    %10 = arith.muli %c1_i32, %c128_i32_9 : i32
    %11 = tpu.assume_multiple %10, 128 : i32
    %c0_10 = arith.constant 0 : index
    %c0_11 = arith.constant 0 : index
    %12 = arith.index_cast %11 : i32 to index
    %13 = vector.load %arg2[%c0_10, %c0_11, %12] : memref<1x4x256xf32, #tpu.memory_space<vmem>>, vector<1x4x128xf32>
    %c0_12 = arith.constant 0 : index
    %c0_13 = arith.constant 0 : index
    %c0_14 = arith.constant 0 : index
    %14 = vector.load %arg8[%c0_12, %c0_13, %c0_14] : memref<1x4x128xf32, #tpu.memory_space<vmem>>, vector<1x4x128xf32>
    %15 = arith.addf %14, %13 : vector<1x4x128xf32>
    %c0_15 = arith.constant 0 : index
    %c0_16 = arith.constant 0 : index
    %c0_17 = arith.constant 0 : index
    %16 = vector.load %arg8[%c0_15, %c0_16, %c0_17] : memref<1x4x128xf32, #tpu.memory_space<vmem>>, vector<1x4x128xf32>
    tpu.vector_store %arg8[%c0_15, %c0_16, %c0_17], %15 {strides = array<i32>} : memref<1x4x128xf32, #tpu.memory_space<vmem>>, vector<1x4x128xf32>,
    %c2_i32 = arith.constant 2 : i32
    %c0_i32_18 = arith.constant 0 : i32
    %17 = arith.cmpi eq, %arg1, %c0_i32_18 : i32
    %18 = arith.extui %17 : i1 to i32
    %c0_i32_19 = arith.constant 0 : i32
    %19 = arith.cmpi ne, %18, %c0_i32_19 : i32
    scf.if %19 {
      %c0_20 = arith.constant 0 : index
      %c0_21 = arith.constant 0 : index
      %c0_22 = arith.constant 0 : index
      %20 = vector.load %arg8[%c0_20, %c0_21, %c0_22] : memref<1x4x128xf32, #tpu.memory_space<vmem>>, vector<1x4x128xf32>
      %cst = arith.constant dense<0.000000e+00> : vector<1x4xf32>
      %21 = vector.multi_reduction <add>, %20, %cst [2] : vector<1x4x128xf32> to vector<1x4xf32>
      %cst_23 = arith.constant 3.906250e-03 : f32
      %22 = vector.broadcast %cst_23 : f32 to vector<1x4xf32>
      %23 = arith.mulf %21, %22 : vector<1x4xf32>
      %c0_24 = arith.constant 0 : index
      %c0_25 = arith.constant 0 : index
      %24 = vector.load %arg3[%c0_24, %c0_25] : memref<4x32xf32, #tpu.memory_space<vmem>>, vector<4x32xf32>
      %cst_26 = arith.constant dense<0.000000e+00> : vector<1x32xf32>
      %25 = tpu.matmul %23, %24, %cst_26 {dimension_numbers = #tpu.dot_dimension_numbers<[1], [0], [0], [1], [0, 0, 1, 1], [], []>} : vector<1x4xf32>, vector<4x32xf32>, vector<1x32xf32> -> vector<1x32xf32>
      %c0_27 = arith.constant 0 : index
      %c0_28 = arith.constant 0 : index
      %26 = vector.load %arg4[%c0_27, %c0_28] : memref<1x32xf32, #tpu.memory_space<vmem>>, vector<1x32xf32>
      %27 = arith.addf %25, %26 : vector<1x32xf32>
      %c0_29 = arith.constant 0 : index
      %c0_30 = arith.constant 0 : index
      %28 = vector.load %arg5[%c0_29, %c0_30] : memref<32x256xf32, #tpu.memory_space<vmem>>, vector<32x256xf32>
      %cst_31 = arith.constant dense<0.000000e+00> : vector<1x256xf32>
      %29 = tpu.matmul %27, %28, %cst_31 {dimension_numbers = #tpu.dot_dimension_numbers<[1], [0], [0], [1], [0, 0, 1, 1], [], []>} : vector<1x32xf32>, vector<32x256xf32>, vector<1x256xf32> -> vector<1x256xf32>
      %c0_32 = arith.constant 0 : index
      %c0_33 = arith.constant 0 : index
      %30 = vector.load %arg6[%c0_32, %c0_33] : memref<1x256xf32, #tpu.memory_space<vmem>>, vector<1x256xf32>
      %31 = arith.addf %29, %30 : vector<1x256xf32>
      %32 = vector.extract_strided_slice %31 {offsets = [0, 0], sizes = [1, 128], strides = [1, 1]} : vector<1x256xf32> to vector<1x128xf32>
      %33 = vector.extract_strided_slice %31 {offsets = [0, 128], sizes = [1, 128], strides = [1, 1]} : vector<1x256xf32> to vector<1x128xf32>
      %34 = arith.maximumf %32, %33 : vector<1x128xf32>
      %35 = arith.subf %32, %34 : vector<1x128xf32>
      %36 = math.exp %35 : vector<1x128xf32>
      %37 = arith.subf %33, %34 : vector<1x128xf32>
      %38 = math.exp %37 : vector<1x128xf32>
      %39 = arith.addf %36, %38 : vector<1x128xf32>
      %cst_34 = arith.constant 1.000000e+00 : f32
      %40 = vector.broadcast %cst_34 : f32 to vector<1x128xf32>
      %41 = arith.divf %40, %39 : vector<1x128xf32>
      %42 = arith.mulf %36, %41 : vector<1x128xf32>
      %43 = arith.mulf %38, %41 : vector<1x128xf32>
      %44 = tpu.concatenate %42, %43 in 1 : vector<1x128xf32>, vector<1x128xf32> -> vector<1x256xf32>
      %45 = vector.shape_cast %44 : vector<1x256xf32> to vector<1x1x256xf32>
      %c0_35 = arith.constant 0 : index
      %c0_36 = arith.constant 0 : index
      %c0_37 = arith.constant 0 : index
      %46 = vector.load %arg7[%c0_35, %c0_36, %c0_37] : memref<1x1x256xf32, #tpu.memory_space<vmem>>, vector<1x1x256xf32>
      tpu.vector_store %arg7[%c0_35, %c0_36, %c0_37], %45 {strides = array<i32>} : memref<1x1x256xf32, #tpu.memory_space<vmem>>, vector<1x1x256xf32>,
    } else {
    }
    return
  }
  func.func @transform_0(%arg0: i32, %arg1: i32) -> (i32, i32, i32) {
    %c0_i32 = arith.constant 0 : i32
    %c0_i32_0 = arith.constant 0 : i32
    return %arg0, %c0_i32, %arg1 : i32, i32, i32
  }
  func.func @transform_1(%arg0: i32, %arg1: i32) -> (i32, i32) {
    %c0_i32 = arith.constant 0 : i32
    %c0_i32_0 = arith.constant 0 : i32
    %c0_i32_1 = arith.constant 0 : i32
    return %c0_i32, %c0_i32_0 : i32, i32
  }
  func.func @transform_2(%arg0: i32, %arg1: i32) -> (i32, i32) {
    %c0_i32 = arith.constant 0 : i32
    %c0_i32_0 = arith.constant 0 : i32
    %c0_i32_1 = arith.constant 0 : i32
    return %c0_i32, %c0_i32_0 : i32, i32
  }
  func.func @transform_3(%arg0: i32, %arg1: i32) -> (i32, i32) {
    %c0_i32 = arith.constant 0 : i32
    %c0_i32_0 = arith.constant 0 : i32
    %c0_i32_1 = arith.constant 0 : i32
    return %c0_i32, %c0_i32_0 : i32, i32
  }
  func.func @transform_4(%arg0: i32, %arg1: i32) -> (i32, i32) {
    %c0_i32 = arith.constant 0 : i32
    %c0_i32_0 = arith.constant 0 : i32
    %c0_i32_1 = arith.constant 0 : i32
    return %c0_i32, %c0_i32_0 : i32, i32
  }
  func.func @transform_5(%arg0: i32, %arg1: i32) -> (i32, i32, i32) {
    %c0_i32 = arith.constant 0 : i32
    %c0_i32_0 = arith.constant 0 : i32
    %c0_i32_1 = arith.constant 0 : i32
    return %arg0, %c0_i32, %c0_i32_0 : i32, i32, i32
  }
}

</mosaic_0001>

<llo_original>
// kernel: tpu_custom_call.1
$region0: #{tpu_custom_call.1}
  #allocation0 [shape = 'u32[]', space=smem, size = 0x4, offset = 0x4, fixed_abs, tag = 'smem constant byte address 0x4 - core index']
  #allocation1 [shape = 'u32[144,128]{1,0:T(1,128)}', space=vmem, size = 0x12000, scoped, tag = 'internal scratch']
  #allocation2 [shape = 'f32[1,4,128]{2,1,0:T(4,128)}', space=vmem, size = 0x800, scoped, tag = 'scratch operand']
  %s0 = inlined_call_operand.hbm [shape: f32[2,4,256], index: 0, kind: input, shape index: {}]
  %s1 = inlined_call_operand.hbm [shape: f32[4,32], index: 1, kind: input, shape index: {}]
  %s2 = inlined_call_operand.vmem [shape: f32[1,32], index: 2, kind: input, shape index: {}]
  %s3 = inlined_call_operand.hbm [shape: f32[32,256], index: 3, kind: input, shape index: {}]
  %s4 = inlined_call_operand.vmem [shape: f32[1,256], index: 4, kind: input, shape index: {}]
  %s5 = inlined_call_operand.hbm [shape: f32[2,1,256], index: 5, kind: output, shape index: {}]
  %s6 = sld [smem:[#allocation0]]
  $region73: #{tpu_custom_call.1} parent=0
    _
  %s8 = ssub.s32 1, %s6
  %s9 = scalar_select 0, %s8, %s6
  $region1: #{tpu_custom_call.1} parent=0
    #allocation3 [shape = 'u8[8192]{0}', space=vmem, size = 0x2000, scoped, tag = 'input window, operand 0']
    #allocation4 [shape = 's32[2]{0}', space=sflag, size = 0x8, scoped, tag = 'scoped memory for tpu_custom_call.1']
    #allocation5 [shape = 's32[2]{0}', space=sflag, size = 0x8, scoped, tag = 'scoped memory for tpu_custom_call.1']
    #allocation6 [shape = 'u8[2048]{0}', space=vmem, size = 0x800, scoped, tag = 'input window, operand 1, single buffered']
    #allocation7 [shape = 's32[1]{0}', space=sflag, size = 0x4, scoped, tag = 'scoped memory for tpu_custom_call.1']
    #allocation8 [shape = 'u8[32768]{0}', space=vmem, size = 0x8000, scoped, tag = 'input window, operand 3, single buffered']
    #allocation9 [shape = 'u8[2048]{0}', space=vmem, size = 0x800, scoped, tag = 'output window, operand 0']
    %10 = vsyncpa [#allocation4], 0
    %s11 = scalar_lea.sflag [#allocation4], 1
    %12 = vsyncpa %s11, 0
    %13 = vsyncpa [#allocation7], 0
    %14 = vsyncpa [#allocation5], 0
    %s15 = scalar_lea.sflag [#allocation5], 1
    %16 = vsyncpa %s15, 0
    loop: start=0, step=1, limit=4
    $region2: #{tpu_custom_call.1} parent=1 // loop_pre_header
      _
    $region3: #{tpu_custom_call.1} parent=1 // loop_header
      %s18 = sphi 0, %s22
      %p19 = scmp.ge.s32.totalorder %s18, 4
      %s25 = sphi 0, %s37
      %s26 = sphi 0, %s33
      %s27 = sphi 0, %s25
      %s28 = sphi 0, %s26
      %s29 = sphi 0, %s27
      %s30 = sphi 0, %s28
      %s42 = sphi 0, %s44
      %s45 = sphi 0, %s42
      %s46 = sphi 0, %s45
      %s62 = sphi 0, %s46
      %s66 = sphi 0, %s66
      %s68 = sphi 0, %s66
      %s69 = sphi 0, %s68
      %s83 = sphi 0, %s69
      %s87 = sphi 0, %s87
      %s89 = sphi 0, %s87
      %s90 = sphi 0, %s89
      %s104 = sphi 0, %s90
      %s108 = sphi 0, %s108
      %s110 = sphi 0, %s108
      %s111 = sphi 0, %s110
      %s125 = sphi 0, %s111
      %s129 = sphi 0, %s129
      %s131 = sphi 0, %s129
      %s132 = sphi 0, %s131
      %s146 = sphi 0, %s132
      %s152 = sphi 0, %s154
      %s155 = sphi 0, %s152
      %s156 = sphi 0, %s155
      %s172 = sphi 0, %s156
    $region4: #{tpu_custom_call.1} parent=1 // loop_header_branch
      %21 = sbr.rel (%p19) target = $region8
    $region5: #{tpu_custom_call.1} parent=1 // loop_body
      %s23 = ssub.s32 %s18, 1
      %s24 = ssub.s32 %s18, 2
      %s31 = sadd.s32 1, %s26
      %p32 = scmp.ge.s32.totalorder %s31, 1
      %s33 = scalar_select %p32, 0, %s31
      %s34 = sadd.s32 1, %s25
      %s35 = scalar_select %p32, %s34, %s25
      %p36 = scmp.ge.s32.totalorder %s35, 2
      %s37 = scalar_select %p36, 0, %s35
      %s38 = ssub.s32 %s25, %s37
      %s39 = ssub.s32 %s26, %s33
      %s40 = sor.u32 %s38, %s39
      %p41 = scmp.eq.s32.totalorder %s40, 0
      %s43 = sadd.s32 %s42, 1
      %s44 = scalar_select %p41, %s42, %s43
      %p47 = pneg %p41
      %p48 = scmp.eq.s32.totalorder %s18, 1
      %p49 = por %p47, %p48
      %p50 = scmp.ne.s32.totalorder %s42, %s45
      %p51 = scmp.eq.s32.totalorder %s18, 0
      %p52 = por %p50, %p51
      %p53 = scmp.ne.s32.totalorder %s42, %s45
      %p54 = scmp.eq.s32.totalorder %s23, 1
      %p55 = por %p53, %p54
      %p56 = scmp.ne.s32.totalorder %s45, %s46
      %p57 = scmp.eq.s32.totalorder %s23, 0
      %p58 = por %p56, %p57
      %p59 = scmp.ne.s32.totalorder %s45, %s46
      %p60 = scmp.eq.s32.totalorder %s24, 1
      %p61 = por %p59, %p60
      %p63 = scmp.ne.s32.totalorder %s46, %s62
      %p64 = scmp.eq.s32.totalorder %s24, 0
      %p65 = por %p63, %p64
      %s67 = sadd.s32 %s66, 1
      %p70 = scmp.eq.s32.totalorder %s18, 1
      %p71 = scmp.ne.s32.totalorder %s66, %s68
      %p72 = scmp.eq.s32.totalorder %s18, 0
      %p73 = por %p71, %p72
      %p74 = scmp.ne.s32.totalorder %s66, %s68
      %p75 = scmp.eq.s32.totalorder %s23, 1
      %p76 = por %p74, %p75
      %p77 = scmp.ne.s32.totalorder %s68, %s69
      %p78 = scmp.eq.s32.totalorder %s23, 0
      %p79 = por %p77, %p78
      %p80 = scmp.ne.s32.totalorder %s68, %s69
      %p81 = scmp.eq.s32.totalorder %s24, 1
      %p82 = por %p80, %p81
      %p84 = scmp.ne.s32.totalorder %s69, %s83
      %p85 = scmp.eq.s32.totalorder %s24, 0
      %p86 = por %p84, %p85
      %s88 = sadd.s32 %s87, 1
      %p91 = scmp.eq.s32.totalorder %s18, 1
      %p92 = scmp.ne.s32.totalorder %s87, %s89
      %p93 = scmp.eq.s32.totalorder %s18, 0
      %p94 = por %p92, %p93
      %p95 = scmp.ne.s32.totalorder %s87, %s89
      %p96 = scmp.eq.s32.totalorder %s23, 1
      %p97 = por %p95, %p96
      %p98 = scmp.ne.s32.totalorder %s89, %s90
      %p99 = scmp.eq.s32.totalorder %s23, 0
      %p100 = por %p98, %p99
      %p101 = scmp.ne.s32.totalorder %s89, %s90
      %p102 = scmp.eq.s32.totalorder %s24, 1
      %p103 = por %p101, %p102
      %p105 = scmp.ne.s32.totalorder %s90, %s104
      %p106 = scmp.eq.s32.totalorder %s24, 0
      %p107 = por %p105, %p106
      %s109 = sadd.s32 %s108, 1
      %p112 = scmp.eq.s32.totalorder %s18, 1
      %p113 = scmp.ne.s32.totalorder %s108, %s110
      %p114 = scmp.eq.s32.totalorder %s18, 0
      %p115 = por %p113, %p114
      %p116 = scmp.ne.s32.totalorder %s108, %s110
      %p117 = scmp.eq.s32.totalorder %s23, 1
      %p118 = por %p116, %p117
      %p119 = scmp.ne.s32.totalorder %s110, %s111
      %p120 = scmp.eq.s32.totalorder %s23, 0
      %p121 = por %p119, %p120
      %p122 = scmp.ne.s32.totalorder %s110, %s111
      %p123 = scmp.eq.s32.totalorder %s24, 1
      %p124 = por %p122, %p123
      %p126 = scmp.ne.s32.totalorder %s111, %s125
      %p127 = scmp.eq.s32.totalorder %s24, 0
      %p128 = por %p126, %p127
      %s130 = sadd.s32 %s129, 1
      %p133 = scmp.eq.s32.totalorder %s18, 1
      %p134 = scmp.ne.s32.totalorder %s129, %s131
      %p135 = scmp.eq.s32.totalorder %s18, 0
      %p136 = por %p134, %p135
      %p137 = scmp.ne.s32.totalorder %s129, %s131
      %p138 = scmp.eq.s32.totalorder %s23, 1
      %p139 = por %p137, %p138
      %p140 = scmp.ne.s32.totalorder %s131, %s132
      %p141 = scmp.eq.s32.totalorder %s23, 0
      %p142 = por %p140, %p141
      %p143 = scmp.ne.s32.totalorder %s131, %s132
      %p144 = scmp.eq.s32.totalorder %s24, 1
      %p145 = por %p143, %p144
      %p147 = scmp.ne.s32.totalorder %s132, %s146
      %p148 = scmp.eq.s32.totalorder %s24, 0
      %p149 = por %p147, %p148
      %s150 = ssub.s32 %s25, %s37
      %p151 = scmp.eq.s32.totalorder %s150, 0
      %s153 = sadd.s32 %s152, 1
      %s154 = scalar_select %p151, %s152, %s153
      %p157 = pneg %p151
      %p158 = scmp.eq.s32.totalorder %s18, 1
      %p159 = por %p157, %p158
      %p160 = scmp.ne.s32.totalorder %s152, %s155
      %p161 = scmp.eq.s32.totalorder %s18, 0
      %p162 = por %p160, %p161
      %p163 = scmp.ne.s32.totalorder %s152, %s155
      %p164 = scmp.eq.s32.totalorder %s23, 1
      %p165 = por %p163, %p164
      %p166 = scmp.ne.s32.totalorder %s155, %s156
      %p167 = scmp.eq.s32.totalorder %s23, 0
      %p168 = por %p166, %p167
      %p169 = scmp.ne.s32.totalorder %s155, %s156
      %p170 = scmp.eq.s32.totalorder %s24, 1
      %p171 = por %p169, %p170
      %p173 = scmp.ne.s32.totalorder %s156, %s172
      %p174 = scmp.eq.s32.totalorder %s24, 0
      %p175 = por %p173, %p174
      %p176 = scmp.le.s32.totalorder 1, %s18
      %p177 = scmp.lt.s32.totalorder %s18, 3
      %p178 = pnand %p176, %p177
      %p179 = pneg %p178
      // Predicated region
      $region9: #{tpu_custom_call.1} parent=5 // pred_check
        _
      $region10: #{tpu_custom_call.1} parent=5 // pred_check_branch
        %181 = sbr.rel (%p178) target = $region12
      $region11: #{tpu_custom_call.1} parent=5 // pred_region
        %s182 = ssub.s32 %s18, 1
        // Predicated region
        $region13: #{tpu_custom_call.1} parent=11 // pred_check
          %p183 = pneg %p79
        $region14: #{tpu_custom_call.1} parent=11 // pred_check_branch
          %185 = sbr.rel (%p183) target = $region16
        $region15: #{tpu_custom_call.1} parent=11 // pred_region
          %s187 = ssub.s32 64, 64
          %188 = vsyncadd [#allocation7], %s187
          %s190 = sshll.u32 [#allocation6], 4
          %s191 = int_to_ptr.vmem [resolvable:$true] %s190
          %193 = dma.hbm_to_vmem [thread:$0]  %s1, 64, %s191, [#allocation7]
        $region16: #{tpu_custom_call.1} parent=11 // pred_fallthru
          _
        // Predicated region
        $region17: #{tpu_custom_call.1} parent=11 // pred_check
          %p194 = pneg %p100
        $region18: #{tpu_custom_call.1} parent=11 // pred_check_branch
          %196 = sbr.rel (%p194) target = $region20
        $region19: #{tpu_custom_call.1} parent=11 // pred_region
          _
        $region20: #{tpu_custom_call.1} parent=11 // pred_fallthru
          _
        // Predicated region
        $region21: #{tpu_custom_call.1} parent=11 // pred_check
          %p197 = pneg %p121
        $region22: #{tpu_custom_call.1} parent=11 // pred_check_branch
          %199 = sbr.rel (%p197) target = $region24
        $region23: #{tpu_custom_call.1} parent=11 // pred_region
          %s201 = ssub.s32 1024, 1024
          %202 = vsyncadd [#allocation7], %s201
          %s203 = sshll.u32 [#allocation8], 4
          %s204 = int_to_ptr.vmem [resolvable:$true] %s203
          %209 = dma.hbm_to_vmem [thread:$0]  %s3, 1024, %s204, [#allocation7], 256, 256, 16
        $region24: #{tpu_custom_call.1} parent=11 // pred_fallthru
          _
        // Predicated region
        $region25: #{tpu_custom_call.1} parent=11 // pred_check
          %p210 = pneg %p142
        $region26: #{tpu_custom_call.1} parent=11 // pred_check_branch
          %212 = sbr.rel (%p210) target = $region28
        $region27: #{tpu_custom_call.1} parent=11 // pred_region
          _
        $region28: #{tpu_custom_call.1} parent=11 // pred_fallthru
          _
      $region12: #{tpu_custom_call.1} parent=5 // pred_fallthru
        _
      %p213 = scmp.lt.s32.totalorder %s18, 2
      // Predicated region
      $region29: #{tpu_custom_call.1} parent=5 // pred_check
        %p214 = pneg %p213
      $region30: #{tpu_custom_call.1} parent=5 // pred_check_branch
        %216 = sbr.rel (%p214) target = $region32
      $region31: #{tpu_custom_call.1} parent=5 // pred_region
        // Predicated region
        $region33: #{tpu_custom_call.1} parent=31 // pred_check
          %p217 = pneg %p52
        $region34: #{tpu_custom_call.1} parent=31 // pred_check_branch
          %219 = sbr.rel (%p217) target = $region36
        $region35: #{tpu_custom_call.1} parent=31 // pred_region
          %s220 = sand.u32 %s42, 1
          %s221 = scalar_lea.sflag [#allocation4], %s220
          %s222 = sand.u32 %s42, 1
          %s223 = smul.addr %s222, 8
          %s224 = scalar_lea.vmem [#allocation3], %s223
          %s225 = smul.u32 2, %s26
          %s227 = ssub.s32 128, 128
          %228 = vsyncadd %s221, %s227
          %s229 = smul.addr %s25, 2
          %s230 = sadd.s32 %s225, %s229
          %s231 = smul.addr %s230, 64
          %s232 = scalar_lea.hbm %s0, %s231
          %s234 = sshll.u32 %s224, 4
          %s235 = int_to_ptr.vmem [resolvable:$true] %s234
          %237 = dma.hbm_to_vmem [thread:$0]  %s232, 128, %s235, %s221
        $region36: #{tpu_custom_call.1} parent=31 // pred_fallthru
          _
      $region32: #{tpu_custom_call.1} parent=5 // pred_fallthru
        _
      %p238 = scmp.le.s32.totalorder 1, %s18
      %p239 = scmp.lt.s32.totalorder %s18, 3
      %p240 = pnand %p238, %p239
      %p241 = pneg %p240
      // Predicated region
      $region37: #{tpu_custom_call.1} parent=5 // pred_check
        _
      $region38: #{tpu_custom_call.1} parent=5 // pred_check_branch
        %243 = sbr.rel (%p240) target = $region40
      $region39: #{tpu_custom_call.1} parent=5 // pred_region
        %s244 = ssub.s32 %s18, 1
        %s245 = sand.u32 %s45, 1
        %s246 = scalar_lea.sflag [#allocation4], %s245
        %s247 = sand.u32 %s45, 1
        %s248 = smul.addr %s247, 8
        %s249 = scalar_lea.vmem [#allocation3], %s248
        // Predicated region
        $region41: #{tpu_custom_call.1} parent=39 // pred_check
          %p250 = pneg %p58
        $region42: #{tpu_custom_call.1} parent=39 // pred_check_branch
          %252 = sbr.rel (%p250) target = $region44
        $region43: #{tpu_custom_call.1} parent=39 // pred_region
          %253 = dma.done %s246, 128
        $region44: #{tpu_custom_call.1} parent=39 // pred_fallthru
          _
        // Predicated region
        $region45: #{tpu_custom_call.1} parent=39 // pred_check
          %p254 = pneg %p79
        $region46: #{tpu_custom_call.1} parent=39 // pred_check_branch
          %256 = sbr.rel (%p254) target = $region48
        $region47: #{tpu_custom_call.1} parent=39 // pred_region
          %257 = dma.done [#allocation7], 64
        $region48: #{tpu_custom_call.1} parent=39 // pred_fallthru
          _
        // Predicated region
        $region49: #{tpu_custom_call.1} parent=39 // pred_check
          %p258 = pneg %p121
        $region50: #{tpu_custom_call.1} parent=39 // pred_check_branch
          %260 = sbr.rel (%p258) target = $region52
        $region51: #{tpu_custom_call.1} parent=39 // pred_region
          %261 = dma.done [#allocation7], 1024
        $region52: #{tpu_custom_call.1} parent=39 // pred_fallthru
          _
        %s262 = sand.u32 %s45, 1
        %s263 = scalar_lea.sflag [#allocation4], %s262
        %s264 = sand.u32 %s45, 1
        %s265 = smul.addr %s264, 8
        %s266 = scalar_lea.vmem [#allocation3], %s265
        %p267 = pneg %p58
        %p268 = pneg %p55
        %p269 = pneg %p79
        %p270 = pneg %p76
        %p271 = pneg %p100
        %p272 = pneg %p97
        %p273 = pneg %p121
        %p274 = pneg %p118
        %p275 = pneg %p142
        %p276 = pneg %p139
        %p277 = pneg %p168
        %p278 = pneg %p165
        %s279 = sand.u32 %s155, 1
        %s280 = scalar_lea.sflag [#allocation5], %s279
        %s281 = sand.u32 %s155, 1
        %s282 = smul.addr %s281, 2
        %s283 = scalar_lea.vmem [#allocation9], %s282
        %s284 = smul.u32 2, %s28
        %p285 = scmp.eq.s32.totalorder %s28, 0
        // Predicated region
        $region53: #{tpu_custom_call.1} parent=39 // pred_check
          %p286 = pneg %p285
        $region54: #{tpu_custom_call.1} parent=39 // pred_check_branch
          %288 = sbr.rel (%p286) target = $region56
        $region55: #{tpu_custom_call.1} parent=39 // pred_region
          %289 = vst [vmem:[#allocation2] sm:$0xf] 0.0
        $region56: #{tpu_custom_call.1} parent=39 // pred_fallthru
          _
        %v290 = vld [vmem:[%s249] sm:$0xf]
        %v291 = vld [vmem:[#allocation2] sm:$0xf]
        %v292 = vadd.f32 %v291, %v290
        %293 = vst [vmem:[#allocation2] sm:$0xf] %v292
        %s294 = scalar_lea.vmem %s249, 4 [#allocation3]
        %v295 = vld [vmem:[%s294] sm:$0xf]
        %v296 = vld [vmem:[#allocation2] sm:$0xf]
        %v297 = vadd.f32 %v296, %v295
        %298 = vst [vmem:[#allocation2] sm:$0xf] %v297
        // Predicated region
        $region57: #{tpu_custom_call.1} parent=39 // pred_check
          %p299 = pneg %p285
        $region58: #{tpu_custom_call.1} parent=39 // pred_check_branch
          %301 = sbr.rel (%p299) target = $region60
        $region59: #{tpu_custom_call.1} parent=39 // pred_region
          %v302 = vld [vmem:[#allocation2] sm:$0xf]
          %vm303 = vcmask 1043456
          %v304 = vsel %vm303, %v302, 0.0
          %305 = vadd.xlane.f32.xlu0 %v304
          %v306 = vpop.xlane.xlu0 %305
          %v307 = vmul.f32 %v306, 0.00390625
          %v308 = vld [vmem:[#allocation6] sm:$0xf]
          %v309 = vld [vmem:[%s2] sm:$0x1]
          %v311 = vlaneseq
          %v312 = vand.u32 %v311, 127
          %v313 = vlaneseq
          %v314 = vshrl.u32 %v313, 7
          %v315 = vsub.s32 %v312, %v314
          %v316 = vrot.slane %v307, %v315
          %vm317 = vcmask 31744
          %v318 = vsel %vm317, %v316, 0
          %v321 = vsel %vm303, %v308, 0
          %323 = vmatprep.subr.mxu0 0.0
          %324 = vmatpush1.msra.mxu0 0.0
          %325 = vmatprep.subr.mxu0 0.0
          %326 = vmatpush1.msra.mxu0 0.0
          %327 = vmatprep.subr.mxu0 0.0
          %328 = vmatpush1.msra.mxu0 0.0
          %329 = vmatprep.subr.mxu0 0.0
          %330 = vmatpush1.msra.mxu0 0.0
          %331 = vmatprep.subr.mxu0 0.0
          %332 = vmatpush1.msra.mxu0 0.0
          %333 = vmatprep.subr.mxu0 0.0
          %334 = vmatpush1.msra.mxu0 0.0
          %335 = vmatprep.subr.mxu0 0.0
          %336 = vmatpush1.msra.mxu0 0.0
          %337 = vmatprep.subr.mxu0 0.0
          %338 = vmatpush1.msra.mxu0 0.0
          %339 = vmatprep.subr.mxu0 0.0
          %340 = vmatpush1.msra.mxu0 0.0
          %341 = vmatprep.subr.mxu0 0.0
          %342 = vmatpush1.msra.mxu0 0.0
          %343 = vmatprep.subr.mxu0 0.0
          %344 = vmatpush1.msra.mxu0 0.0
          %345 = vmatprep.subr.mxu0 0.0
          %346 = vmatpush1.msra.mxu0 0.0
          %347 = vmatprep.subr.mxu0 0.0
          %348 = vmatpush1.msra.mxu0 0.0
          %349 = vmatprep.subr.mxu0 0.0
          %350 = vmatpush1.msra.mxu0 0.0
          %351 = vmatprep.subr.mxu0 0.0
          %352 = vmatpush1.msra.mxu0 0.0
          %353 = vmatprep.subr.mxu0 0.0
          %354 = vmatpush1.msra.mxu0 %v321
          %355 = vmatprep.subr.mxu0 0.0
          %356 = vmatpush2.msra.mxu0 0.0
          %357 = vmatprep.subr.mxu0 0.0
          %358 = vmatpush2.msra.mxu0 0.0
          %359 = vmatprep.subr.mxu0 0.0
          %360 = vmatpush2.msra.mxu0 0.0
          %361 = vmatprep.subr.mxu0 0.0
          %362 = vmatpush2.msra.mxu0 0.0
          %363 = vmatprep.subr.mxu0 0.0
          %364 = vmatpush2.msra.mxu0 0.0
          %365 = vmatprep.subr.mxu0 0.0
          %366 = vmatpush2.msra.mxu0 0.0
          %367 = vmatprep.subr.mxu0 0.0
          %368 = vmatpush2.msra.mxu0 0.0
          %369 = vmatprep.subr.mxu0 0.0
          %370 = vmatpush2.msra.mxu0 0.0
          %371 = vmatprep.subr.mxu0 0.0
          %372 = vmatpush2.msra.mxu0 0.0
          %373 = vmatprep.subr.mxu0 0.0
          %374 = vmatpush2.msra.mxu0 0.0
          %375 = vmatprep.subr.mxu0 0.0
          %376 = vmatpush2.msra.mxu0 0.0
          %377 = vmatprep.subr.mxu0 0.0
          %378 = vmatpush2.msra.mxu0 0.0
          %379 = vmatprep.subr.mxu0 0.0
          %380 = vmatpush2.msra.mxu0 0.0
          %381 = vmatprep.subr.mxu0 0.0
          %382 = vmatpush2.msra.mxu0 0.0
          %383 = vmatprep.subr.mxu0 0.0
          %384 = vmatpush2.msra.mxu0 0.0
          %385 = vmatprep.subr.mxu0 0.0
          %386 = vmatpush2.msra.mxu0 0.0
          %387 = vmatprep.mubr.f32.mxu0 0.0
          %388 = vmatmul.mubr.f32.gmra.mxu0 %v318
          %v389 = vpop.f32.mrf.mxu0
          %v390 = vadd.f32 %v309, %v389
          %v391 = vpop.f32.mrf.mxu0
          %392 = vdwg.mxu0
          %v393 = vld [vmem:[#allocation8] sm:$0xff]
          %v394 = vld [vmem:[#allocation8 + $0x8] sm:$0xff]
          %v395 = vld [vmem:[#allocation8 + $0x10] sm:$0xff]
          %v396 = vld [vmem:[#allocation8 + $0x18] sm:$0xff]
          %v397 = vld [vmem:[#allocation8 + $0x20] sm:$0xff]
          %v398 = vld [vmem:[#allocation8 + $0x28] sm:$0xff]
          %v399 = vld [vmem:[#allocation8 + $0x30] sm:$0xff]
          %v400 = vld [vmem:[#allocation8 + $0x38] sm:$0xff]
          %v401 = vld [vmem:[%s4] sm:$0x3]
          %v403 = vlaneseq
          %v404 = vshrl.u32 %v403, 7
          %v405 = vsub.s32 0, %v404
          %v406 = vrot.slane %v401, %v405
          %v407 = vlaneseq
          %v408 = vshrl.u32 %v407, 7
          %v409 = vsub.s32 1, %v408
          %v410 = vrot.slane %v401, %v409
          %vm413 = vcmask 261120
          %v415 = vsel %vm413, %v390, 0
          %417 = vmatprep.subr.mxu0 0.0
          %418 = vmatpush1.msra.mxu0 0.0
          %419 = vmatprep.subr.mxu0 0.0
          %420 = vmatpush1.msra.mxu0 0.0
          %421 = vmatprep.subr.mxu0 0.0
          %422 = vmatpush1.msra.mxu0 0.0
          %423 = vmatprep.subr.mxu0 0.0
          %424 = vmatpush1.msra.mxu0 0.0
          %425 = vmatprep.subr.mxu0 0.0
          %426 = vmatpush1.msra.mxu0 0.0
          %427 = vmatprep.subr.mxu0 0.0
          %428 = vmatpush1.msra.mxu0 0.0
          %429 = vmatprep.subr.mxu0 0.0
          %430 = vmatpush1.msra.mxu0 0.0
          %431 = vmatprep.subr.mxu0 0.0
          %432 = vmatpush1.msra.mxu0 0.0
          %433 = vmatprep.subr.mxu0 0.0
          %434 = vmatpush1.msra.mxu0 0.0
          %435 = vmatprep.subr.mxu0 0.0
          %436 = vmatpush1.msra.mxu0 0.0
          %437 = vmatprep.subr.mxu0 0.0
          %438 = vmatpush1.msra.mxu0 0.0
          %439 = vmatprep.subr.mxu0 0.0
          %440 = vmatpush1.msra.mxu0 0.0
          %441 = vmatprep.subr.mxu0 %v400
          %442 = vmatpush1.msra.mxu0 %v399
          %443 = vmatprep.subr.mxu0 %v398
          %444 = vmatpush1.msra.mxu0 %v397
          %445 = vmatprep.subr.mxu0 %v396
          %446 = vmatpush1.msra.mxu0 %v395
          %447 = vmatprep.subr.mxu0 %v394
          %448 = vmatpush1.msra.mxu0 %v393
          %449 = vmatprep.subr.mxu0 0.0
          %450 = vmatpush2.msra.mxu0 0.0
          %451 = vmatprep.subr.mxu0 0.0
          %452 = vmatpush2.msra.mxu0 0.0
          %453 = vmatprep.subr.mxu0 0.0
          %454 = vmatpush2.msra.mxu0 0.0
          %455 = vmatprep.subr.mxu0 0.0
          %456 = vmatpush2.msra.mxu0 0.0
          %457 = vmatprep.subr.mxu0 0.0
          %458 = vmatpush2.msra.mxu0 0.0
          %459 = vmatprep.subr.mxu0 0.0
          %460 = vmatpush2.msra.mxu0 0.0
          %461 = vmatprep.subr.mxu0 0.0
          %462 = vmatpush2.msra.mxu0 0.0
          %463 = vmatprep.subr.mxu0 0.0
          %464 = vmatpush2.msra.mxu0 0.0
          %465 = vmatprep.subr.mxu0 0.0
          %466 = vmatpush2.msra.mxu0 0.0
          %467 = vmatprep.subr.mxu0 0.0
          %468 = vmatpush2.msra.mxu0 0.0
          %469 = vmatprep.subr.mxu0 0.0
          %470 = vmatpush2.msra.mxu0 0.0
          %471 = vmatprep.subr.mxu0 0.0
          %472 = vmatpush2.msra.mxu0 0.0
          %473 = vmatprep.subr.mxu0 0.0
          %474 = vmatpush2.msra.mxu0 0.0
          %475 = vmatprep.subr.mxu0 0.0
          %476 = vmatpush2.msra.mxu0 0.0
          %477 = vmatprep.subr.mxu0 0.0
          %478 = vmatpush2.msra.mxu0 0.0
          %479 = vmatprep.subr.mxu0 0.0
          %480 = vmatpush2.msra.mxu0 0.0
          %481 = vmatprep.mubr.f32.mxu0 0.0
          %482 = vmatmul.mubr.f32.gmra.mxu0 %v415
          %v483 = vpop.f32.mrf.mxu0
          %v484 = vadd.f32 %v406, %v483
          %v485 = vpop.f32.mrf.mxu0
          %v486 = vadd.f32 %v410, %v485
          %487 = vdwg.mxu0
          %v488 = vmax.f32 %v484, %v486
          %v489 = vsub.f32 %v484, %v488
          %v490 = vmul.f32 %v489, 1.442695
          %v491 = vpow.pop %v490
          %v492 = vsub.f32 %v486, %v488
          %v493 = vmul.f32 %v492, 1.442695
          %v494 = vpow.pop %v493
          %v495 = vadd.f32 %v491, %v494
          %v496 = vrcp.pop %v495
          %v497 = vmul.f32 1.0, %v496
          %v498 = vmul.f32 %v491, %v497
          %v499 = vmul.f32 %v494, %v497
          %v502 = vcombine.low %v498, %v499
          %v504 = vunpack.c.l.s4 1966171168
          %v505 = vunpack.c.0.s8 %v504
          %v506 = vlaneseq
          %v507 = vshrl.u32 %v506, 7
          %v508 = vsub.s32 %v505, %v507
          %v509 = vrot.slane %v502, %v508
          %v511 = vunpack.c.l.s4 1966171168
          %v512 = vunpack.c.0.s8 %v511
          %v513 = vlaneseq
          %v514 = vshrl.u32 %v513, 7
          %v515 = vsub.s32 %v512, %v514
          %v516 = vrot.slane %v509, %v515
          %v518 = vlaneseq
          %vm519 = vcmp.ge.s32.totalorder %v518, 0
          %vm520 = vcmp.lt.s32.totalorder %v518, 256
          %vm521 = vmand %vm519, %vm520
          %522 = vst.msk [vmem:[%s283] sm:$0x3] %vm521, %v516
        $region60: #{tpu_custom_call.1} parent=39 // pred_fallthru
          _
        %s523 = sand.u32 %s155, 1
        %s524 = scalar_lea.sflag [#allocation5], %s523
        %s525 = sand.u32 %s155, 1
        %s526 = smul.addr %s525, 2
        %s527 = scalar_lea.vmem [#allocation9], %s526
        // Predicated region
        $region61: #{tpu_custom_call.1} parent=39 // pred_check
          %p528 = pneg %p165
        $region62: #{tpu_custom_call.1} parent=39 // pred_check_branch
          %530 = sbr.rel (%p528) target = $region64
        $region63: #{tpu_custom_call.1} parent=39 // pred_region
          %s532 = ssub.s32 32, 32
          %533 = vsyncadd %s524, %s532
          %s534 = smul.addr %s27, 2
          %s535 = smul.addr %s534, 16
          %s536 = scalar_lea.hbm %s5, %s535
          %s538 = sshll.u32 %s527, 4
          %s539 = int_to_ptr.vmem [resolvable:$true] %s538
          %541 = dma.vmem_to_hbm [thread:$0]  %s539, 32, %s536, %s524
        $region64: #{tpu_custom_call.1} parent=39 // pred_fallthru
          _
      $region40: #{tpu_custom_call.1} parent=5 // pred_fallthru
        _
      %p542 = scmp.le.s32.totalorder 2, %s18
      // Predicated region
      $region65: #{tpu_custom_call.1} parent=5 // pred_check
        %p543 = pneg %p542
      $region66: #{tpu_custom_call.1} parent=5 // pred_check_branch
        %545 = sbr.rel (%p543) target = $region68
      $region67: #{tpu_custom_call.1} parent=5 // pred_region
        %s546 = ssub.s32 %s18, 2
        // Predicated region
        $region69: #{tpu_custom_call.1} parent=67 // pred_check
          %p547 = pneg %p171
        $region70: #{tpu_custom_call.1} parent=67 // pred_check_branch
          %549 = sbr.rel (%p547) target = $region72
        $region71: #{tpu_custom_call.1} parent=67 // pred_region
          %s550 = sand.u32 %s156, 1
          %s551 = scalar_lea.sflag [#allocation5], %s550
          %s552 = sand.u32 %s156, 1
          %s553 = smul.addr %s552, 2
          %s554 = scalar_lea.vmem [#allocation9], %s553
          %555 = dma.done %s551, 32
        $region72: #{tpu_custom_call.1} parent=67 // pred_fallthru
          _
      $region68: #{tpu_custom_call.1} parent=5 // pred_fallthru
        _
    $region6: #{tpu_custom_call.1} parent=1 // loop_footer
      %s22 = sadd.s32 1, %s18
    $region7: #{tpu_custom_call.1} parent=1 // loop_footer_branch
      %17 = sbr.rel target = $region3
    $region8: #{tpu_custom_call.1} parent=1 // loop_exit
      _
    %556 = vsyncpa [#allocation4], 1
    %s557 = scalar_lea.sflag [#allocation4], 1
    %558 = vsyncpa %s557, 1
    %559 = vsyncpa [#allocation7], 1
    %560 = vsyncpa [#allocation5], 1
    %s561 = scalar_lea.sflag [#allocation5], 1
    %562 = vsyncpa %s561, 1

</llo_original>
